<compile_context>
chip_gen: v7x
topology: tpu7x:2x2x1
jax: 0.10.0
libtpu: 0.0.40
codegen_flags: <defaults>
</compile_context>

<pallas_src>
import math

import numpy as np
import jax
import jax.numpy as jnp
from jax.experimental import pallas as pl
from jax.experimental.pallas import tpu as pltpu


# ---------------------------------------------------------------------------
# helpers
# ---------------------------------------------------------------------------
def _round_up(x: int, m: int) -> int:
    return ((x + m - 1) // m) * m


def _cdiv(a: int, b: int) -> int:
    return -(-a // b)


def _block_budget_bytes() -> int:
    """Per-pipeline-buffer budget (output tile + lane-padded t tile)."""
    try:
        kind = jax.devices()[0].device_kind.lower()
    except Exception:
        return 8 << 20
    if "v7" in kind or "7x" in kind:
        return 12 << 20          # v7x: 3.2 TB/s HBM, amortize per-step overhead
    if "v5e" in kind or "v5 lite" in kind or "v5lite" in kind:
        return 4 << 20           # v5e: 16 MiB scoped VMEM default, keep tiles small
    return 8 << 20               # v6e / default


# ---------------------------------------------------------------------------
# kernels
# ---------------------------------------------------------------------------
def _mxu_kernel(t_ref, e_ref, b_ref, o_ref):
    # t_ref: (tile_r, Kp) f32   e_ref: (Kp, lane_w) f32   b_ref: (1, lane_w) f32
    # o_ref: (tile_r, lane_w) out_dtype
    # Lane expansion + scale multiply on the (otherwise idle) MXU.  HIGHEST
    # precision keeps the phase (scale * t) at ~f32 accuracy.
    arg = jnp.dot(
        t_ref[...], e_ref[...],
        preferred_element_type=jnp.float32,
        precision=jax.lax.Precision.HIGHEST,
    )
    o_ref[...] = jnp.sin(arg + b_ref[...]).astype(o_ref.dtype)


def _vpu_kernel(t_ref, s_ref, b_ref, o_ref):
    # t_ref: (tile_r, 1) f32   s_ref/b_ref: (1, lane_w) f32
    arg = b_ref[...] + s_ref[...] * t_ref[...]
    o_ref[...] = jnp.sin(arg).astype(o_ref.dtype)


# ---------------------------------------------------------------------------
# planning & constant tables (hoisted out of the per-call path)
# ---------------------------------------------------------------------------
def _plan(dim: int):
    """Returns (L, Kp, lane_w, dim_pad, use_mxu)."""
    if dim % 128 == 0:
        L, lane_w, dim_pad = 1, dim, dim
    else:
        g = math.gcd(dim, 128)
        L = 128 // g
        if L * dim <= 1024:                  # packed: L timesteps per output row
            lane_w, dim_pad = L * dim, dim
        else:                                # lane-pad the embedding dim instead
            L = 1
            dim_pad = _round_up(dim, 128)
            lane_w = dim_pad
    use_mxu = L > 1
    Kp = max(L, 8) if use_mxu else 1         # pad contraction dim to 8 sublanes
    return L, Kp, lane_w, dim_pad, use_mxu


def _build_tables(scale: jax.Array, bias: jax.Array, plan):
    """Constant (Kp, lane_w) expansion matrix (or (1, lane_w) scale row) + bias row."""
    L, Kp, lane_w, dim_pad, use_mxu = plan
    dim = int(scale.shape[-1])
    s = scale.reshape(-1).astype(jnp.float32)
    b = bias.reshape(-1).astype(jnp.float32)
    if dim_pad != dim:
        s = jnp.pad(s, (0, dim_pad - dim))   # padded lanes -> sin(0)=0, sliced off
        b = jnp.pad(b, (0, dim_pad - dim))
    bias_row = jnp.tile(b, L).reshape(1, lane_w)
    if use_mxu:
        eye = jnp.eye(L, dtype=jnp.float32)                       # (L, L)
        table = (eye[:, :, None] * s[None, None, :]).reshape(L, lane_w)
        if Kp > L:
            table = jnp.pad(table, ((0, Kp - L), (0, 0)))         # zero rows
    else:
        table = s.reshape(1, lane_w)
    return table, bias_row


# ---------------------------------------------------------------------------
# forward
# ---------------------------------------------------------------------------
def _nyquist_forward(t, table, bias_row, plan, dim, out_dtype,
                     min_pallas_elements, max_tile_rows):
    L, Kp, lane_w, dim_pad, use_mxu = plan
    lead_shape = t.shape
    B = int(np.prod(lead_shape)) if len(lead_shape) > 0 else 1
    t_flat = t.reshape(-1).astype(jnp.float32)

    # Tiny workloads: kernel launch is pure overhead; let XLA fuse it instead.
    if B * dim < min_pallas_elements:
        sv = table[0, :dim]
        bv = bias_row[0, :dim]
        out = jnp.sin(bv[None, :] + sv[None, :] * t_flat[:, None])
        return out.astype(out_dtype).reshape(*lead_shape, dim)

    # Pack L timesteps per output row; only the B % L remainder is padded.
    rows = _cdiv(B, L)
    if rows * L != B:
        t_flat = jnp.pad(t_flat, (0, rows * L - B))
    t2d = t_flat.reshape(rows, L)
    if Kp > L:
        t2d = jnp.pad(t2d, ((0, 0), (0, Kp - L)))          # zero cols, zero rows in E

    # Row tile: per-generation budget, counting output + the lane-padded t block
    # (a (tile_r, Kp) f32 block occupies tile_r*512 B of VMEM regardless of Kp).
    out_itemsize = jnp.dtype(out_dtype).itemsize
    per_row_bytes = lane_w * out_itemsize + 128 * 4
    tile_r = max(8, (_block_budget_bytes() // per_row_bytes) // 8 * 8)
    tile_r = min(tile_r, 32768)
    # Guarantee >=~4 grid steps when rows permit (v7x megacore + pipeline overlap).
    tile_r = min(tile_r, max(8, _round_up(_cdiv(rows, 4), 8)))
    if max_tile_rows is not None:
        tile_r = min(tile_r, max(8, (max_tile_rows // 8) * 8))
    tile_r = min(tile_r, _round_up(rows, 8))
    grid = (_cdiv(rows, tile_r),)

    n_out = rows * lane_w
    cost = pl.CostEstimate(
        flops=2 * rows * Kp * lane_w + 2 * n_out,
        transcendentals=n_out,                 # one sin per output element
        bytes_accessed=rows * Kp * 4 + n_out * out_itemsize + (Kp + 1) * lane_w * 4,
    )

    kernel = _mxu_kernel if use_mxu else _vpu_kernel
    out = pl.pallas_call(
        kernel,
        out_shape=jax.ShapeDtypeStruct((rows, lane_w), out_dtype),
        grid=grid,
        in_specs=[
            pl.BlockSpec((tile_r, Kp), lambda i: (i, 0)),       # t: tiled over rows
            pl.BlockSpec((Kp if use_mxu else 1, lane_w), lambda i: (0, 0)),  # E / scale
            pl.BlockSpec((1, lane_w), lambda i: (0, 0)),        # bias: VMEM-resident
        ],
        out_specs=pl.BlockSpec((tile_r, lane_w), lambda i: (i, 0)),
        compiler_params=pltpu.CompilerParams(
            dimension_semantics=("parallel",),                  # shard over v7x's 2 TCs
        ),
        cost_estimate=cost,
    )(t2d, table, bias_row)

    # (rows, L*dim_pad) row-major == (rows*L, dim_pad); drop remainder rows /
    # padded lanes (no-op slices when nothing was padded).
    out = out.reshape(rows * L, dim_pad)
    if rows * L != B or dim_pad != dim:
        out = out[:B, :dim]
    return out.reshape(*lead_shape, dim)


# ---------------------------------------------------------------------------
# public API
# ---------------------------------------------------------------------------
def make_nyquist_params(dim: int, timesteps: float):
    """Deterministic parameter construction matching the PyTorch __init__."""
    assert dim % 2 == 0
    T = timesteps
    k = dim // 2
    nyquist_frequency = T / 2
    golden_ratio = (1 + np.sqrt(5)) / 2
    frequencies = np.geomspace(1 / 8, nyquist_frequency / (2 * golden_ratio), num=k)
    scale = np.repeat(2 * np.pi * frequencies / timesteps, 2).astype(np.float32)
    bias = np.tile(np.array([0.0, np.pi / 2]), k).astype(np.float32)
    return jnp.asarray(scale), jnp.asarray(bias)


def make_nyquist_embedding(dim: int, timesteps: float, *,
                           out_dtype=jnp.float32,
                           min_pallas_elements: int = 1 << 14,
                           max_tile_rows: int | None = None):
    """Factory: builds scale/bias and the VMEM-resident constant tables once.

    Use out_dtype=jnp.bfloat16 when the consumer accepts it: compute stays f32,
    HBM writeback halves.
    """
    scale, bias = make_nyquist_params(dim, timesteps)
    plan = _plan(dim)
    table, bias_row = _build_tables(scale, bias, plan)

    def embed(t: jax.Array) -> jax.Array:
        return _nyquist_forward(t, table, bias_row, plan, dim, out_dtype,
                                min_pallas_elements, max_tile_rows)

    return embed


def nyquist_frequency_embedding(t: jax.Array, scale: jax.Array, bias: jax.Array, *,
                                out_dtype=jnp.float32,
                                min_pallas_elements: int = 1 << 14,
                                max_tile_rows: int | None = None) -> jax.Array:
    """Functional API: sin(bias + scale * t[..., None]). Prefer make_nyquist_embedding
    (it hoists the constant tables out of the per-call path)."""
    dim = int(scale.shape[-1])
    plan = _plan(dim)
    table, bias_row = _build_tables(scale, bias, plan)
    return _nyquist_forward(t, table, bias_row, plan, dim, out_dtype,
                            min_pallas_elements, max_tile_rows)


# ---------------------------------------------------------------------------
# self-test
# ---------------------------------------------------------------------------
if __name__ == "__main__":
    def reference(t, scale, bias):
        dim = scale.shape[0]
        flat = t.reshape(-1, 1).astype(jnp.float32)
        ref = jnp.sin(bias[None, :].astype(jnp.float32)
                      + scale[None, :].astype(jnp.float32) * flat)
        return ref.reshape(*t.shape, dim)

    key = jax.random.PRNGKey(0)
    # (dim, timesteps, t_shape, max_tile_rows, out_dtype, atol) — exercises:
    # MXU-packed L=4 / L=2 / L=8 paths, ragged B % L, dim % 128 == 0 path with
    # a ragged grid, lane-padded dim fallback, multi-tile ragged grid, bf16 out.
    cases = [
        (32, 16, (8,), None, jnp.float32, 1e-3),
        (64, 24, (37,), None, jnp.float32, 1e-3),
        (48, 100, (19,), None, jnp.float32, 1e-3),
        (256, 32, (2, 5), None, jnp.float32, 1e-3),
        (200, 50, (11,), None, jnp.float32, 1e-3),
        (32, 16, (80,), 8, jnp.float32, 1e-3),
        (64, 24, (33,), None, jnp.bfloat16, 1e-2),
    ]
    for dim, T, t_shape, mtr, odt, atol in cases:
        scale, bias = make_nyquist_params(dim, T)
        key, sub = jax.random.split(key)
        t = jax.random.uniform(sub, t_shape, dtype=jnp.float32) * T
        embed = make_nyquist_embedding(dim, T, out_dtype=odt,
                                       min_pallas_elements=0, max_tile_rows=mtr)
        out = jax.block_until_ready(embed(t))
        ref = reference(t, scale, bias)
        assert out.shape == t_shape + (dim,), (out.shape, t_shape, dim)
        np.testing.assert_allclose(np.asarray(out, dtype=np.float32), np.asarray(ref),
                                   rtol=1e-3, atol=atol)

    # Functional API smoke test (per-call tables).
    scale, bias = make_nyquist_params(32, 16)
    t = jax.random.uniform(jax.random.PRNGKey(1), (12,), dtype=jnp.float32) * 16
    out = jax.block_until_ready(
        nyquist_frequency_embedding(t, scale, bias, min_pallas_elements=0))
    np.testing.assert_allclose(np.asarray(out), np.asarray(reference(t, scale, bias)),
                               rtol=1e-3, atol=1e-3)

    print("KERNEL_OK")
</pallas_src>

<mosaic_0001>
module attributes {stable_mosaic.version = 11 : i64} {
  func.func @_mxu_kernel(%arg0: i32, %arg1: memref<8x8xf32, #tpu.memory_space<vmem>>, %arg2: memref<8x128xf32, #tpu.memory_space<vmem>>, %arg3: memref<1x128xf32, #tpu.memory_space<vmem>>, %arg4: memref<8x128xf32, #tpu.memory_space<vmem>>) attributes {dimension_semantics = [#tpu.dimension_semantics<parallel>], iteration_bounds = array<i64: 1>, scalar_prefetch = 0 : i64, scratch_operands = 0 : i64, tpu.core_type = #tpu.core_type<tc>, window_params = [{transform_indices = @transform_0, window_bounds = array<i64: 8, 8>}, {pipeline_mode = #tpu.pipeline_mode<synchronous>, transform_indices = @transform_1, window_bounds = array<i64: 8, 128>}, {pipeline_mode = #tpu.pipeline_mode<synchronous>, transform_indices = @transform_2, window_bounds = array<i64: 1, 128>}, {transform_indices = @transform_3, window_bounds = array<i64: 8, 128>}]} {
    %c0 = arith.constant 0 : index
    %c0_0 = arith.constant 0 : index
    %0 = vector.load %arg1[%c0, %c0_0] : memref<8x8xf32, #tpu.memory_space<vmem>>, vector<8x8xf32>
    %c0_1 = arith.constant 0 : index
    %c0_2 = arith.constant 0 : index
    %1 = vector.load %arg2[%c0_1, %c0_2] : memref<8x128xf32, #tpu.memory_space<vmem>>, vector<8x128xf32>
    %cst = arith.constant dense<0.000000e+00> : vector<8x128xf32>
    %2 = tpu.matmul %0, %1, %cst {dimension_numbers = #tpu.dot_dimension_numbers<[1], [0], [0], [1], [0, 0, 1, 1], [], []>, precision = #tpu.contract_precision<fp32>} : vector<8x8xf32>, vector<8x128xf32>, vector<8x128xf32> -> vector<8x128xf32>
    %c0_3 = arith.constant 0 : index
    %c0_4 = arith.constant 0 : index
    %3 = vector.load %arg3[%c0_3, %c0_4] : memref<1x128xf32, #tpu.memory_space<vmem>>, vector<1x128xf32>
    %4 = vector.broadcast %3 : vector<1x128xf32> to vector<8x128xf32>
    %5 = arith.addf %2, %4 : vector<8x128xf32>
    %6 = math.sin %5 : vector<8x128xf32>
    %c0_5 = arith.constant 0 : index
    %c0_6 = arith.constant 0 : index
    %7 = vector.load %arg4[%c0_5, %c0_6] : memref<8x128xf32, #tpu.memory_space<vmem>>, vector<8x128xf32>
    tpu.vector_store %arg4[%c0_5, %c0_6], %6 {strides = array<i32>} : memref<8x128xf32, #tpu.memory_space<vmem>>, vector<8x128xf32>,
    return
  }
  func.func @transform_0(%arg0: i32) -> (i32, i32) {
    %c0_i32 = arith.constant 0 : i32
    %c0_i32_0 = arith.constant 0 : i32
    return %arg0, %c0_i32 : i32, i32
  }
  func.func @transform_1(%arg0: i32) -> (i32, i32) {
    %c0_i32 = arith.constant 0 : i32
    %c0_i32_0 = arith.constant 0 : i32
    %c0_i32_1 = arith.constant 0 : i32
    return %c0_i32, %c0_i32_0 : i32, i32
  }
  func.func @transform_2(%arg0: i32) -> (i32, i32) {
    %c0_i32 = arith.constant 0 : i32
    %c0_i32_0 = arith.constant 0 : i32
    %c0_i32_1 = arith.constant 0 : i32
    return %c0_i32, %c0_i32_0 : i32, i32
  }
  func.func @transform_3(%arg0: i32) -> (i32, i32) {
    %c0_i32 = arith.constant 0 : i32
    %c0_i32_0 = arith.constant 0 : i32
    return %arg0, %c0_i32 : i32, i32
  }
}

</mosaic_0001>

<llo_original>
// kernel: tpu_custom_call.1
$region0: #{tpu_custom_call.1}
  #allocation0 [shape = 'u32[]', space=smem, size = 0x4, offset = 0x4, fixed_abs, tag = 'smem constant byte address 0x4 - core index']
  #allocation1 [shape = 'u32[144,128]{1,0:T(1,128)}', space=vmem, size = 0x12000, scoped, tag = 'internal scratch']
  %s0 = inlined_call_operand.hbm [shape: f32[2,8], index: 0, kind: input, shape index: {}]
  %s1 = inlined_call_operand.hbm [shape: f32[8,128], index: 1, kind: input, shape index: {}]
  %s2 = inlined_call_operand.vmem [shape: f32[1,128], index: 2, kind: input, shape index: {}]
  %s3 = inlined_call_operand.hbm [shape: f32[2,128], index: 3, kind: output, shape index: {}]
  %s4 = sld [smem:[#allocation0]]
  $region30: #{tpu_custom_call.1} parent=0
    _
  %s6 = ssub.s32 1, %s4
  %s7 = scalar_select 0, %s6, %s4
  $region1: #{tpu_custom_call.1} parent=0
    #allocation2 [shape = 'u8[4096]{0}', space=vmem, size = 0x1000, scoped, tag = 'input window, operand 0, single buffered']
    #allocation3 [shape = 's32[1]{0}', space=sflag, size = 0x4, scoped, tag = 'scoped memory for tpu_custom_call.1']
    #allocation4 [shape = 's32[1]{0}', space=sflag, size = 0x4, scoped, tag = 'scoped memory for tpu_custom_call.1']
    #allocation5 [shape = 'u8[4096]{0}', space=vmem, size = 0x1000, scoped, tag = 'input window, operand 1, single buffered']
    #allocation6 [shape = 's32[1]{0}', space=sflag, size = 0x4, scoped, tag = 'scoped memory for tpu_custom_call.1']
    #allocation7 [shape = 'u8[4096]{0}', space=vmem, size = 0x1000, scoped, tag = 'output window, operand 0, single buffered']
    %8 = vsyncpa [#allocation3], 0
    %9 = vsyncpa [#allocation6], 0
    %10 = vsyncpa [#allocation4], 0
    // Predicated region
    $region2: #{tpu_custom_call.1} parent=1 // pred_check
      _
    $region3: #{tpu_custom_call.1} parent=1 // pred_check_branch
      %12 = sbr.rel (0) target = $region5
    $region4: #{tpu_custom_call.1} parent=1 // pred_region
      %s14 = ssub.s32 128, 32
      %15 = vsyncadd [#allocation3], %s14
      %s16 = sshll.u32 [#allocation2], 4
      %s17 = int_to_ptr.vmem [resolvable:$true] %s16
      %22 = dma.hbm_to_vmem [thread:$0]  %s0, 32, %s17, [#allocation3], 32, 32, 2
    $region5: #{tpu_custom_call.1} parent=1 // pred_fallthru
      _
    // Predicated region
    $region6: #{tpu_custom_call.1} parent=1 // pred_check
      _
    $region7: #{tpu_custom_call.1} parent=1 // pred_check_branch
      %24 = sbr.rel (0) target = $region9
    $region8: #{tpu_custom_call.1} parent=1 // pred_region
      %s26 = ssub.s32 128, 128
      %27 = vsyncadd [#allocation6], %s26
      %s29 = sshll.u32 [#allocation5], 4
      %s30 = int_to_ptr.vmem [resolvable:$true] %s29
      %32 = dma.hbm_to_vmem [thread:$0]  %s1, 128, %s30, [#allocation6]
    $region9: #{tpu_custom_call.1} parent=1 // pred_fallthru
      _
    // Predicated region
    $region10: #{tpu_custom_call.1} parent=1 // pred_check
      _
    $region11: #{tpu_custom_call.1} parent=1 // pred_check_branch
      %34 = sbr.rel (0) target = $region13
    $region12: #{tpu_custom_call.1} parent=1 // pred_region
      _
    $region13: #{tpu_custom_call.1} parent=1 // pred_fallthru
      _
    // Predicated region
    $region14: #{tpu_custom_call.1} parent=1 // pred_check
      _
    $region15: #{tpu_custom_call.1} parent=1 // pred_check_branch
      %36 = sbr.rel (0) target = $region17
    $region16: #{tpu_custom_call.1} parent=1 // pred_region
      %37 = dma.done [#allocation3], 128
    $region17: #{tpu_custom_call.1} parent=1 // pred_fallthru
      _
    // Predicated region
    $region18: #{tpu_custom_call.1} parent=1 // pred_check
      _
    $region19: #{tpu_custom_call.1} parent=1 // pred_check_branch
      %39 = sbr.rel (0) target = $region21
    $region20: #{tpu_custom_call.1} parent=1 // pred_region
      %40 = dma.done [#allocation6], 128
    $region21: #{tpu_custom_call.1} parent=1 // pred_fallthru
      _
    %v41 = vld [vmem:[#allocation2] sm:$0xff]
    %v42 = vld [vmem:[#allocation5] sm:$0xff]
    %v43 = vld [vmem:[%s2] sm:$0x1]
    %v45 = vlaneseq
    %v46 = vshrl.u32 %v45, 7
    %v47 = vsub.s32 0, %v46
    %v48 = vrot.slane %v43, %v47
    %vm50 = vcmask 64512
    %v52 = vsel %vm50, %v41, 0
    %54 = vmatprep.subr.mxu0 0.0
    %v55 = vand.u32 %v42, 4294901760
    %56 = vmatpush1.msra.mxu0 %v55
    %57 = vmatprep.subr.mxu0 0.0
    %58 = vmatpush1.msra.mxu0 0.0
    %59 = vmatprep.subr.mxu0 0.0
    %60 = vmatpush1.msra.mxu0 0.0
    %61 = vmatprep.subr.mxu0 0.0
    %62 = vmatpush1.msra.mxu0 0.0
    %63 = vmatprep.subr.mxu0 0.0
    %64 = vmatpush1.msra.mxu0 0.0
    %65 = vmatprep.subr.mxu0 0.0
    %66 = vmatpush1.msra.mxu0 0.0
    %67 = vmatprep.subr.mxu0 0.0
    %68 = vmatpush1.msra.mxu0 0.0
    %69 = vmatprep.subr.mxu0 0.0
    %70 = vmatpush1.msra.mxu0 0.0
    %71 = vmatprep.subr.mxu0 0.0
    %72 = vmatpush1.msra.mxu0 0.0
    %73 = vmatprep.subr.mxu0 0.0
    %74 = vmatpush1.msra.mxu0 0.0
    %75 = vmatprep.subr.mxu0 0.0
    %76 = vmatpush1.msra.mxu0 0.0
    %77 = vmatprep.subr.mxu0 0.0
    %78 = vmatpush1.msra.mxu0 0.0
    %79 = vmatprep.subr.mxu0 0.0
    %80 = vmatpush1.msra.mxu0 0.0
    %81 = vmatprep.subr.mxu0 0.0
    %82 = vmatpush1.msra.mxu0 0.0
    %83 = vmatprep.subr.mxu0 0.0
    %84 = vmatpush1.msra.mxu0 0.0
    %85 = vmatprep.subr.mxu0 0.0
    %86 = vmatpush1.msra.mxu0 0.0
    %87 = vmatprep.subr.mxu0 0.0
    %88 = vmatpush1.msra.mxu0 0.0
    %89 = vmatprep.subr.mxu0 0.0
    %90 = vmatpush1.msra.mxu0 0.0
    %91 = vmatprep.subr.mxu0 0.0
    %92 = vmatpush1.msra.mxu0 0.0
    %93 = vmatprep.subr.mxu0 0.0
    %94 = vmatpush1.msra.mxu0 0.0
    %95 = vmatprep.subr.mxu0 0.0
    %96 = vmatpush1.msra.mxu0 0.0
    %97 = vmatprep.subr.mxu0 0.0
    %98 = vmatpush1.msra.mxu0 0.0
    %99 = vmatprep.subr.mxu0 0.0
    %100 = vmatpush1.msra.mxu0 0.0
    %101 = vmatprep.subr.mxu0 0.0
    %102 = vmatpush1.msra.mxu0 0.0
    %103 = vmatprep.subr.mxu0 0.0
    %104 = vmatpush1.msra.mxu0 0.0
    %105 = vmatprep.subr.mxu0 0.0
    %106 = vmatpush1.msra.mxu0 0.0
    %107 = vmatprep.subr.mxu0 0.0
    %108 = vmatpush1.msra.mxu0 0.0
    %109 = vmatprep.subr.mxu0 0.0
    %110 = vmatpush1.msra.mxu0 0.0
    %111 = vmatprep.subr.mxu0 0.0
    %112 = vmatpush1.msra.mxu0 0.0
    %113 = vmatprep.subr.mxu0 0.0
    %114 = vmatpush1.msra.mxu0 0.0
    %115 = vmatprep.subr.mxu0 0.0
    %116 = vmatpush1.msra.mxu0 0.0
    %117 = vmatprep.subr.mxu0 0.0
    %118 = vmatpush1.msra.mxu0 0.0
    %119 = vmatprep.mubr.f32.mxu0 0.0
    %v120 = vand.u32 %v52, 4294901760
    %v121 = vsub.f32 %v52, %v120
    %v122 = vand.u32 %v121, 4294901760
    %v123 = vsub.f32 %v121, %v122
    %v124 = vand.u32 %v123, 4294901760
    %125 = vmatmul.mubr.f32.gmra.mrb[0].mxu0 %v124
    %v126 = vpop.f32.mrb[0].mxu0
    %v127 = vadd.f32 %v48, %v126
    %v128 = vpop.f32.mrb[0].mxu0
    %129 = vdwg.mxu0
    %130 = vmatprep.subr.mxu0 0.0
    %v131 = vand.u32 %v42, 4294901760
    %v132 = vsub.f32 %v42, %v131
    %v133 = vand.u32 %v132, 4294901760
    %v134 = vsub.f32 %v132, %v133
    %v135 = vand.u32 %v134, 4294901760
    %136 = vmatpush1.msra.mxu0 %v135
    %137 = vmatprep.subr.mxu0 0.0
    %138 = vmatpush1.msra.mxu0 0.0
    %139 = vmatprep.subr.mxu0 0.0
    %140 = vmatpush1.msra.mxu0 0.0
    %141 = vmatprep.subr.mxu0 0.0
    %142 = vmatpush1.msra.mxu0 0.0
    %143 = vmatprep.subr.mxu0 0.0
    %144 = vmatpush1.msra.mxu0 0.0
    %145 = vmatprep.subr.mxu0 0.0
    %146 = vmatpush1.msra.mxu0 0.0
    %147 = vmatprep.subr.mxu0 0.0
    %148 = vmatpush1.msra.mxu0 0.0
    %149 = vmatprep.subr.mxu0 0.0
    %150 = vmatpush1.msra.mxu0 0.0
    %151 = vmatprep.subr.mxu0 0.0
    %152 = vmatpush1.msra.mxu0 0.0
    %153 = vmatprep.subr.mxu0 0.0
    %154 = vmatpush1.msra.mxu0 0.0
    %155 = vmatprep.subr.mxu0 0.0
    %156 = vmatpush1.msra.mxu0 0.0
    %157 = vmatprep.subr.mxu0 0.0
    %158 = vmatpush1.msra.mxu0 0.0
    %159 = vmatprep.subr.mxu0 0.0
    %160 = vmatpush1.msra.mxu0 0.0
    %161 = vmatprep.subr.mxu0 0.0
    %162 = vmatpush1.msra.mxu0 0.0
    %163 = vmatprep.subr.mxu0 0.0
    %164 = vmatpush1.msra.mxu0 0.0
    %165 = vmatprep.subr.mxu0 0.0
    %166 = vmatpush1.msra.mxu0 0.0
    %167 = vmatprep.subr.mxu0 0.0
    %168 = vmatpush1.msra.mxu0 0.0
    %169 = vmatprep.subr.mxu0 0.0
    %170 = vmatpush1.msra.mxu0 0.0
    %171 = vmatprep.subr.mxu0 0.0
    %172 = vmatpush1.msra.mxu0 0.0
    %173 = vmatprep.subr.mxu0 0.0
    %174 = vmatpush1.msra.mxu0 0.0
    %175 = vmatprep.subr.mxu0 0.0
    %176 = vmatpush1.msra.mxu0 0.0
    %177 = vmatprep.subr.mxu0 0.0
    %178 = vmatpush1.msra.mxu0 0.0
    %179 = vmatprep.subr.mxu0 0.0
    %180 = vmatpush1.msra.mxu0 0.0
    %181 = vmatprep.subr.mxu0 0.0
    %182 = vmatpush1.msra.mxu0 0.0
    %183 = vmatprep.subr.mxu0 0.0
    %184 = vmatpush1.msra.mxu0 0.0
    %185 = vmatprep.subr.mxu0 0.0
    %186 = vmatpush1.msra.mxu0 0.0
    %187 = vmatprep.subr.mxu0 0.0
    %188 = vmatpush1.msra.mxu0 0.0
    %189 = vmatprep.subr.mxu0 0.0
    %190 = vmatpush1.msra.mxu0 0.0
    %191 = vmatprep.subr.mxu0 0.0
    %192 = vmatpush1.msra.mxu0 0.0
    %193 = vmatprep.subr.mxu0 0.0
    %194 = vmatpush1.msra.mxu0 0.0
    %195 = vmatprep.subr.mxu0 0.0
    %196 = vmatpush1.msra.mxu0 0.0
    %197 = vmatprep.subr.mxu0 0.0
    %198 = vmatpush1.msra.mxu0 0.0
    %199 = vmatprep.mubr.f32.mxu0 0.0
    %v200 = vand.u32 %v52, 4294901760
    %201 = vmatmul.mubr.f32.gmra.mrb[0].mxu0 %v200
    %v202 = vpop.f32.mrb[0].mxu0
    %v203 = vadd.f32 %v127, %v202
    %v204 = vpop.f32.mrb[0].mxu0
    %205 = vdwg.mxu0
    %206 = vmatprep.subr.mxu0 0.0
    %v207 = vand.u32 %v42, 4294901760
    %v208 = vsub.f32 %v42, %v207
    %209 = vmatpush1.msra.mxu0 %v208
    %210 = vmatprep.subr.mxu0 0.0
    %211 = vmatpush1.msra.mxu0 0.0
    %212 = vmatprep.subr.mxu0 0.0
    %213 = vmatpush1.msra.mxu0 0.0
    %214 = vmatprep.subr.mxu0 0.0
    %215 = vmatpush1.msra.mxu0 0.0
    %216 = vmatprep.subr.mxu0 0.0
    %217 = vmatpush1.msra.mxu0 0.0
    %218 = vmatprep.subr.mxu0 0.0
    %219 = vmatpush1.msra.mxu0 0.0
    %220 = vmatprep.subr.mxu0 0.0
    %221 = vmatpush1.msra.mxu0 0.0
    %222 = vmatprep.subr.mxu0 0.0
    %223 = vmatpush1.msra.mxu0 0.0
    %224 = vmatprep.subr.mxu0 0.0
    %225 = vmatpush1.msra.mxu0 0.0
    %226 = vmatprep.subr.mxu0 0.0
    %227 = vmatpush1.msra.mxu0 0.0
    %228 = vmatprep.subr.mxu0 0.0
    %229 = vmatpush1.msra.mxu0 0.0
    %230 = vmatprep.subr.mxu0 0.0
    %231 = vmatpush1.msra.mxu0 0.0
    %232 = vmatprep.subr.mxu0 0.0
    %233 = vmatpush1.msra.mxu0 0.0
    %234 = vmatprep.subr.mxu0 0.0
    %235 = vmatpush1.msra.mxu0 0.0
    %236 = vmatprep.subr.mxu0 0.0
    %237 = vmatpush1.msra.mxu0 0.0
    %238 = vmatprep.subr.mxu0 0.0
    %239 = vmatpush1.msra.mxu0 0.0
    %240 = vmatprep.subr.mxu0 0.0
    %241 = vmatpush1.msra.mxu0 0.0
    %242 = vmatprep.subr.mxu0 0.0
    %243 = vmatpush1.msra.mxu0 0.0
    %244 = vmatprep.subr.mxu0 0.0
    %245 = vmatpush1.msra.mxu0 0.0
    %246 = vmatprep.subr.mxu0 0.0
    %247 = vmatpush1.msra.mxu0 0.0
    %248 = vmatprep.subr.mxu0 0.0
    %249 = vmatpush1.msra.mxu0 0.0
    %250 = vmatprep.subr.mxu0 0.0
    %251 = vmatpush1.msra.mxu0 0.0
    %252 = vmatprep.subr.mxu0 0.0
    %253 = vmatpush1.msra.mxu0 0.0
    %254 = vmatprep.subr.mxu0 0.0
    %255 = vmatpush1.msra.mxu0 0.0
    %256 = vmatprep.subr.mxu0 0.0
    %257 = vmatpush1.msra.mxu0 0.0
    %258 = vmatprep.subr.mxu0 0.0
    %259 = vmatpush1.msra.mxu0 0.0
    %260 = vmatprep.subr.mxu0 0.0
    %261 = vmatpush1.msra.mxu0 0.0
    %262 = vmatprep.subr.mxu0 0.0
    %263 = vmatpush1.msra.mxu0 0.0
    %264 = vmatprep.subr.mxu0 0.0
    %265 = vmatpush1.msra.mxu0 0.0
    %266 = vmatprep.subr.mxu0 0.0
    %267 = vmatpush1.msra.mxu0 0.0
    %268 = vmatprep.subr.mxu0 0.0
    %269 = vmatpush1.msra.mxu0 0.0
    %270 = vmatprep.subr.mxu0 0.0
    %271 = vmatpush1.msra.mxu0 0.0
    %272 = vmatprep.mubr.f32.mxu0 0.0
    %v273 = vand.u32 %v52, 4294901760
    %v274 = vsub.f32 %v52, %v273
    %275 = vmatmul.mubr.f32.gmra.mrb[0].mxu0 %v274
    %v276 = vpop.f32.mrb[0].mxu0
    %v277 = vadd.f32 %v203, %v276
    %v278 = vpop.f32.mrb[0].mxu0
    %279 = vdwg.mxu0
    %280 = vmatprep.subr.mxu0 0.0
    %v281 = vand.u32 %v42, 4294901760
    %282 = vmatpush1.msra.mxu0 %v281
    %283 = vmatprep.subr.mxu0 0.0
    %284 = vmatpush1.msra.mxu0 0.0
    %285 = vmatprep.subr.mxu0 0.0
    %286 = vmatpush1.msra.mxu0 0.0
    %287 = vmatprep.subr.mxu0 0.0
    %288 = vmatpush1.msra.mxu0 0.0
    %289 = vmatprep.subr.mxu0 0.0
    %290 = vmatpush1.msra.mxu0 0.0
    %291 = vmatprep.subr.mxu0 0.0
    %292 = vmatpush1.msra.mxu0 0.0
    %293 = vmatprep.subr.mxu0 0.0
    %294 = vmatpush1.msra.mxu0 0.0
    %295 = vmatprep.subr.mxu0 0.0
    %296 = vmatpush1.msra.mxu0 0.0
    %297 = vmatprep.subr.mxu0 0.0
    %298 = vmatpush1.msra.mxu0 0.0
    %299 = vmatprep.subr.mxu0 0.0
    %300 = vmatpush1.msra.mxu0 0.0
    %301 = vmatprep.subr.mxu0 0.0
    %302 = vmatpush1.msra.mxu0 0.0
    %303 = vmatprep.subr.mxu0 0.0
    %304 = vmatpush1.msra.mxu0 0.0
    %305 = vmatprep.subr.mxu0 0.0
    %306 = vmatpush1.msra.mxu0 0.0
    %307 = vmatprep.subr.mxu0 0.0
    %308 = vmatpush1.msra.mxu0 0.0
    %309 = vmatprep.subr.mxu0 0.0
    %310 = vmatpush1.msra.mxu0 0.0
    %311 = vmatprep.subr.mxu0 0.0
    %312 = vmatpush1.msra.mxu0 0.0
    %313 = vmatprep.subr.mxu0 0.0
    %314 = vmatpush1.msra.mxu0 0.0
    %315 = vmatprep.subr.mxu0 0.0
    %316 = vmatpush1.msra.mxu0 0.0
    %317 = vmatprep.subr.mxu0 0.0
    %318 = vmatpush1.msra.mxu0 0.0
    %319 = vmatprep.subr.mxu0 0.0
    %320 = vmatpush1.msra.mxu0 0.0
    %321 = vmatprep.subr.mxu0 0.0
    %322 = vmatpush1.msra.mxu0 0.0
    %323 = vmatprep.subr.mxu0 0.0
    %324 = vmatpush1.msra.mxu0 0.0
    %325 = vmatprep.subr.mxu0 0.0
    %326 = vmatpush1.msra.mxu0 0.0
    %327 = vmatprep.subr.mxu0 0.0
    %328 = vmatpush1.msra.mxu0 0.0
    %329 = vmatprep.subr.mxu0 0.0
    %330 = vmatpush1.msra.mxu0 0.0
    %331 = vmatprep.subr.mxu0 0.0
    %332 = vmatpush1.msra.mxu0 0.0
    %333 = vmatprep.subr.mxu0 0.0
    %334 = vmatpush1.msra.mxu0 0.0
    %335 = vmatprep.subr.mxu0 0.0
    %336 = vmatpush1.msra.mxu0 0.0
    %337 = vmatprep.subr.mxu0 0.0
    %338 = vmatpush1.msra.mxu0 0.0
    %339 = vmatprep.subr.mxu0 0.0
    %340 = vmatpush1.msra.mxu0 0.0
    %341 = vmatprep.subr.mxu0 0.0
    %342 = vmatpush1.msra.mxu0 0.0
    %343 = vmatprep.subr.mxu0 0.0
    %344 = vmatpush1.msra.mxu0 0.0
    %345 = vmatprep.mubr.f32.mxu0 0.0
    %v346 = vand.u32 %v52, 4294901760
    %v347 = vsub.f32 %v52, %v346
    %v348 = vand.u32 %v347, 4294901760
    %349 = vmatmul.mubr.f32.gmra.mrb[0].mxu0 %v348
    %v350 = vpop.f32.mrb[0].mxu0
    %v351 = vadd.f32 %v277, %v350
    %v352 = vpop.f32.mrb[0].mxu0
    %353 = vdwg.mxu0
    %354 = vmatprep.subr.mxu0 0.0
    %v355 = vand.u32 %v42, 4294901760
    %v356 = vsub.f32 %v42, %v355
    %v357 = vand.u32 %v356, 4294901760
    %358 = vmatpush1.msra.mxu0 %v357
    %359 = vmatprep.subr.mxu0 0.0
    %360 = vmatpush1.msra.mxu0 0.0
    %361 = vmatprep.subr.mxu0 0.0
    %362 = vmatpush1.msra.mxu0 0.0
    %363 = vmatprep.subr.mxu0 0.0
    %364 = vmatpush1.msra.mxu0 0.0
    %365 = vmatprep.subr.mxu0 0.0
    %366 = vmatpush1.msra.mxu0 0.0
    %367 = vmatprep.subr.mxu0 0.0
    %368 = vmatpush1.msra.mxu0 0.0
    %369 = vmatprep.subr.mxu0 0.0
    %370 = vmatpush1.msra.mxu0 0.0
    %371 = vmatprep.subr.mxu0 0.0
    %372 = vmatpush1.msra.mxu0 0.0
    %373 = vmatprep.subr.mxu0 0.0
    %374 = vmatpush1.msra.mxu0 0.0
    %375 = vmatprep.subr.mxu0 0.0
    %376 = vmatpush1.msra.mxu0 0.0
    %377 = vmatprep.subr.mxu0 0.0
    %378 = vmatpush1.msra.mxu0 0.0
    %379 = vmatprep.subr.mxu0 0.0
    %380 = vmatpush1.msra.mxu0 0.0
    %381 = vmatprep.subr.mxu0 0.0
    %382 = vmatpush1.msra.mxu0 0.0
    %383 = vmatprep.subr.mxu0 0.0
    %384 = vmatpush1.msra.mxu0 0.0
    %385 = vmatprep.subr.mxu0 0.0
    %386 = vmatpush1.msra.mxu0 0.0
    %387 = vmatprep.subr.mxu0 0.0
    %388 = vmatpush1.msra.mxu0 0.0
    %389 = vmatprep.subr.mxu0 0.0
    %390 = vmatpush1.msra.mxu0 0.0
    %391 = vmatprep.subr.mxu0 0.0
    %392 = vmatpush1.msra.mxu0 0.0
    %393 = vmatprep.subr.mxu0 0.0
    %394 = vmatpush1.msra.mxu0 0.0
    %395 = vmatprep.subr.mxu0 0.0
    %396 = vmatpush1.msra.mxu0 0.0
    %397 = vmatprep.subr.mxu0 0.0
    %398 = vmatpush1.msra.mxu0 0.0
    %399 = vmatprep.subr.mxu0 0.0
    %400 = vmatpush1.msra.mxu0 0.0
    %401 = vmatprep.subr.mxu0 0.0
    %402 = vmatpush1.msra.mxu0 0.0
    %403 = vmatprep.subr.mxu0 0.0
    %404 = vmatpush1.msra.mxu0 0.0
    %405 = vmatprep.subr.mxu0 0.0
    %406 = vmatpush1.msra.mxu0 0.0
    %407 = vmatprep.subr.mxu0 0.0
    %408 = vmatpush1.msra.mxu0 0.0
    %409 = vmatprep.subr.mxu0 0.0
    %410 = vmatpush1.msra.mxu0 0.0
    %411 = vmatprep.subr.mxu0 0.0
    %412 = vmatpush1.msra.mxu0 0.0
    %413 = vmatprep.subr.mxu0 0.0
    %414 = vmatpush1.msra.mxu0 0.0
    %415 = vmatprep.subr.mxu0 0.0
    %416 = vmatpush1.msra.mxu0 0.0
    %417 = vmatprep.subr.mxu0 0.0
    %418 = vmatpush1.msra.mxu0 0.0
    %419 = vmatprep.subr.mxu0 0.0
    %420 = vmatpush1.msra.mxu0 0.0
    %421 = vmatprep.mubr.f32.mxu0 0.0
    %v422 = vand.u32 %v52, 4294901760
    %423 = vmatmul.mubr.f32.gmra.mrb[0].mxu0 %v422
    %v424 = vpop.f32.mrb[0].mxu0
    %v425 = vadd.f32 %v351, %v424
    %v426 = vpop.f32.mrb[0].mxu0
    %427 = vdwg.mxu0
    %428 = vmatprep.subr.mxu0 0.0
    %v429 = vand.u32 %v42, 4294901760
    %430 = vmatpush1.msra.mxu0 %v429
    %431 = vmatprep.subr.mxu0 0.0
    %432 = vmatpush1.msra.mxu0 0.0
    %433 = vmatprep.subr.mxu0 0.0
    %434 = vmatpush1.msra.mxu0 0.0
    %435 = vmatprep.subr.mxu0 0.0
    %436 = vmatpush1.msra.mxu0 0.0
    %437 = vmatprep.subr.mxu0 0.0
    %438 = vmatpush1.msra.mxu0 0.0
    %439 = vmatprep.subr.mxu0 0.0
    %440 = vmatpush1.msra.mxu0 0.0
    %441 = vmatprep.subr.mxu0 0.0
    %442 = vmatpush1.msra.mxu0 0.0
    %443 = vmatprep.subr.mxu0 0.0
    %444 = vmatpush1.msra.mxu0 0.0
    %445 = vmatprep.subr.mxu0 0.0
    %446 = vmatpush1.msra.mxu0 0.0
    %447 = vmatprep.subr.mxu0 0.0
    %448 = vmatpush1.msra.mxu0 0.0
    %449 = vmatprep.subr.mxu0 0.0
    %450 = vmatpush1.msra.mxu0 0.0
    %451 = vmatprep.subr.mxu0 0.0
    %452 = vmatpush1.msra.mxu0 0.0
    %453 = vmatprep.subr.mxu0 0.0
    %454 = vmatpush1.msra.mxu0 0.0
    %455 = vmatprep.subr.mxu0 0.0
    %456 = vmatpush1.msra.mxu0 0.0
    %457 = vmatprep.subr.mxu0 0.0
    %458 = vmatpush1.msra.mxu0 0.0
    %459 = vmatprep.subr.mxu0 0.0
    %460 = vmatpush1.msra.mxu0 0.0
    %461 = vmatprep.subr.mxu0 0.0
    %462 = vmatpush1.msra.mxu0 0.0
    %463 = vmatprep.subr.mxu0 0.0
    %464 = vmatpush1.msra.mxu0 0.0
    %465 = vmatprep.subr.mxu0 0.0
    %466 = vmatpush1.msra.mxu0 0.0
    %467 = vmatprep.subr.mxu0 0.0
    %468 = vmatpush1.msra.mxu0 0.0
    %469 = vmatprep.subr.mxu0 0.0
    %470 = vmatpush1.msra.mxu0 0.0
    %471 = vmatprep.subr.mxu0 0.0
    %472 = vmatpush1.msra.mxu0 0.0
    %473 = vmatprep.subr.mxu0 0.0
    %474 = vmatpush1.msra.mxu0 0.0
    %475 = vmatprep.subr.mxu0 0.0
    %476 = vmatpush1.msra.mxu0 0.0
    %477 = vmatprep.subr.mxu0 0.0
    %478 = vmatpush1.msra.mxu0 0.0
    %479 = vmatprep.subr.mxu0 0.0
    %480 = vmatpush1.msra.mxu0 0.0
    %481 = vmatprep.subr.mxu0 0.0
    %482 = vmatpush1.msra.mxu0 0.0
    %483 = vmatprep.subr.mxu0 0.0
    %484 = vmatpush1.msra.mxu0 0.0
    %485 = vmatprep.subr.mxu0 0.0
    %486 = vmatpush1.msra.mxu0 0.0
    %487 = vmatprep.subr.mxu0 0.0
    %488 = vmatpush1.msra.mxu0 0.0
    %489 = vmatprep.subr.mxu0 0.0
    %490 = vmatpush1.msra.mxu0 0.0
    %491 = vmatprep.subr.mxu0 0.0
    %492 = vmatpush1.msra.mxu0 0.0
    %493 = vmatprep.mubr.f32.mxu0 0.0
    %v494 = vand.u32 %v52, 4294901760
    %495 = vmatmul.mubr.f32.gmra.mrb[0].mxu0 %v494
    %v496 = vpop.f32.mrb[0].mxu0
    %v497 = vadd.f32 %v425, %v496
    %v498 = vpop.f32.mrb[0].mxu0
    %499 = vdwg.mxu0
    %v500 = vand.u32 2147483647, %v497
    %vm501 = vcmp.le.f32.partialorder %v500, 0.7853982
    %vm502 = vcmp.lt.s32.totalorder %v497, 0
    %v503 = vand.u32 %v497, 2139095040
    %v504 = vshrl.u32 %v503, 23
    %v505 = vsub.s32 %v504, 127
    %v506 = vand.u32 2147483647, %v497
    %v507 = vand.u32 %v506, 8388607
    %v508 = vor.u32 %v507, 8388608
    %v509 = vsub.s32 0, %v508
    %v510 = vadd.s32 %v505, 1
    %vm511 = vcmp.gt.s32.totalorder %v510, 0
    %v512 = vsel %vm511, %v510, 0
    %v513 = vshrl.u32 %v512, 5
    %v514 = vand.u32 %v512, 31
    %v515 = vsub.s32 32, %v514
    %v516 = vshrl.u32 683565275, %v515
    %v517 = vshll.u32 683565275, %v514
    %v518 = vshrl.u32 2475754826, %v515
    %v519 = vor.u32 %v517, %v518
    %v520 = vshll.u32 2475754826, %v514
    %v521 = vshrl.u32 2131351028, %v515
    %v522 = vor.u32 %v520, %v521
    %v523 = vshll.u32 2131351028, %v514
    %v524 = vshrl.u32 2102212464, %v515
    %v525 = vor.u32 %v523, %v524
    %v526 = vshll.u32 2102212464, %v514
    %v527 = vshrl.u32 920167782, %v515
    %v528 = vor.u32 %v526, %v527
    %v529 = vshll.u32 920167782, %v514
    %v530 = vshrl.u32 1326507024, %v515
    %v531 = vor.u32 %v529, %v530
    %vm532 = vcmp.lt.s32.totalorder %v513, 1
    %vm533 = vcmp.lt.s32.totalorder %v513, 2
    %vm534 = vcmp.lt.s32.totalorder %v513, 3
    %vm535 = vcmp.lt.s32.totalorder %v513, 4
    %v536 = vsel %vm532, %v516, %v519
    %v537 = vsel %vm535, %v525, 2102212464
    %v538 = vsel %vm534, %v522, %v537
    %v539 = vsel %vm533, %v536, %v538
    %v540 = vsel %vm532, %v519, %v522
    %v541 = vsel %vm535, %v528, 920167782
    %v542 = vsel %vm534, %v525, %v541
    %v543 = vsel %vm533, %v540, %v542
    %v544 = vsel %vm532, %v522, %v525
    %v545 = vsel %vm535, %v531, 1326507024
    %v546 = vsel %vm534, %v528, %v545
    %v547 = vsel %vm533, %v544, %v546
    %v548 = vshll.u32 %v508, 8
    %v549 = vmul.u32.u64.compose %v548, %v547
    %v550 = vextract.low.u32 %v549
    %v551 = vextract.high.u32 %v549
    %v552 = vmul.u32.u64.compose %v548, %v543
    %v553 = vextract.low.u32 %v552
    %v554 = vextract.high.u32 %v552
    %v555 = vmul.u32 %v548, %v539
    %v556 = vadd.s32 %v551, %v553
    %vm557 = vc.u32 %v551, %v553
    %v558 = vadd.s32 %v554, 1
    %v559 = vsel %vm557, %v558, %v554
    %v560 = vadd.s32 %v555, %v559
    %v561 = vadd.s32 %v560, 536870912
    %v562 = vshrl.u32 %v561, 30
    %v563 = vshll.u32 %v562, 30
    %v564 = vsub.s32 %v560, %v563
    %vm565 = vcmp.lt.s32.totalorder %v564, 0
    %v566 = vsub.s32 0, %v564
    %v567 = vsel %vm565, %v566, %v564
    %v568 = vclz %v567
    %v569 = vsub.s32 %v568, 2
    %vm570 = vcmp.gt.s32.totalorder 0, %v569
    %v571 = vsel %vm570, 0, %v569
    %v572 = vsub.s32 32, %v571
    %v573 = vshll.u32 %v564, %v571
    %v574 = vshrl.u32 %v556, %v572
    %v575 = vor.u32 %v573, %v574
    %v576 = vsub.s32 4294967266, %v571
    %v577 = vadd.s32 %v576, 127
    %v578 = vshll.u32 %v577, 23
    %v579 = vor.u32 4788187, %v578
    %v580 = vand.u32 2147483647, %v579
    %v582 = vcvt.s32.f32 %v575
    %v583 = vmul.f32 %v582, %v580
    %v584 = vxor.u32 %v583, 2147483648
    %v585 = vsel %vm502, %v584, %v583
    %v586 = vsub.s32 4, %v562
    %v587 = vsel %vm502, %v586, %v562
    %v588 = vsel %vm501, %v497, %v585
    %v589 = vsel %vm501, 0, %v587
    %v590 = vcosq.f32.pop %v588
    %v591 = vsinq.f32.pop %v588
    %vm592 = vweird.f32 %v497
    %v593 = vadd.s32 %v589, 3
    %v594 = vand.u32 %v593, 3
    %vm595 = vcmp.lt.s32.totalorder %v594, 2
    %vm596 = vcmp.eq.s32.totalorder %v594, 0
    %v597 = vxor.u32 %v591, 2147483648
    %v598 = vsel %vm596, %v590, %v597
    %vm599 = vcmp.eq.s32.totalorder %v594, 2
    %v600 = vxor.u32 %v590, 2147483648
    %v601 = vsel %vm599, %v600, %v591
    %v602 = vsel %vm595, %v598, %v601
    %v603 = vsel %vm592, nan, %v602
    %604 = vst [vmem:[#allocation7] sm:$0xff] %v603
    // Predicated region
    $region22: #{tpu_custom_call.1} parent=1 // pred_check
      _
    $region23: #{tpu_custom_call.1} parent=1 // pred_check_branch
      %606 = sbr.rel (0) target = $region25
    $region24: #{tpu_custom_call.1} parent=1 // pred_region
      %s608 = ssub.s32 128, 32
      %609 = vsyncadd [#allocation4], %s608
      %s610 = sshll.u32 [#allocation7], 4
      %s611 = int_to_ptr.vmem [resolvable:$true] %s610
      %616 = dma.vmem_to_hbm [thread:$0]  %s611, 32, %s3, [#allocation4], 32, 32, 2
    $region25: #{tpu_custom_call.1} parent=1 // pred_fallthru
      _
    // Predicated region
    $region26: #{tpu_custom_call.1} parent=1 // pred_check
      _
    $region27: #{tpu_custom_call.1} parent=1 // pred_check_branch
      %618 = sbr.rel (0) target = $region29
    $region28: #{tpu_custom_call.1} parent=1 // pred_region
      %619 = dma.done [#allocation4], 128
    $region29: #{tpu_custom_call.1} parent=1 // pred_fallthru
      _
    %620 = vsyncpa [#allocation3], 1
    %621 = vsyncpa [#allocation6], 1
    %622 = vsyncpa [#allocation4], 1

</llo_original>
